<compile_context>
chip_gen: v6e
topology: v6e:2x2x1
jax: 0.10.0
libtpu: 0.0.40
codegen_flags: <defaults>
</compile_context>

<pallas_src>
import jax
import jax.numpy as jnp
import numpy as np
from jax.experimental import pallas as pl
from jax.experimental.pallas import tpu as pltpu


def _decoder_step_kernel(ids_ref, emb_ref, h_ref, wih_ref, whh_ref,
                         bih_ref, bhh_ref, wfc_ref, bfc_ref,
                         out_ref, hnew_ref):
    B, H = hnew_ref.shape
    Vemb = emb_ref.shape[0]

    # --- Embedding gather fused in-kernel via one-hot MXU matmul. -------------
    ids = ids_ref[...]                                            # (B, 1) int32
    onehot = (jax.lax.broadcasted_iota(jnp.int32, (B, Vemb), 1) == ids)
    x = jnp.dot(onehot.astype(emb_ref.dtype), emb_ref[...],
                preferred_element_type=jnp.float32)               # (B, H) f32 (exact bf16 rows)

    h = h_ref[...]                                                # (B, H) f32 carry

    # --- GRU gates: two natural matmuls (no zero padding), bf16 MXU operands,
    #     f32 accumulation and f32 elementwise math. --------------------------
    gi = jnp.dot(x.astype(jnp.bfloat16), wih_ref[...],
                 preferred_element_type=jnp.float32) + bih_ref[...]   # (B, 3H)
    gh = jnp.dot(h.astype(jnp.bfloat16), whh_ref[...],
                 preferred_element_type=jnp.float32) + bhh_ref[...]   # (B, 3H)

    r = jax.nn.sigmoid(gi[:, 0:H] + gh[:, 0:H])
    z = jax.nn.sigmoid(gi[:, H:2 * H] + gh[:, H:2 * H])
    n = jnp.tanh(gi[:, 2 * H:3 * H] + r * gh[:, 2 * H:3 * H])
    h_new = (1.0 - z) * n + z * h                                 # f32 carry
    hnew_ref[...] = h_new

    # --- fc + numerically-stable log_softmax over the vocab (lane axis). -----
    logits = (jnp.dot(h_new.astype(jnp.bfloat16), wfc_ref[...],
                      preferred_element_type=jnp.float32) + bfc_ref[...])   # (B, V)
    m = jnp.max(logits, axis=-1, keepdims=True)
    s = logits - m
    out_ref[...] = s - jnp.log(jnp.sum(jnp.exp(s), axis=-1, keepdims=True))


def pack_params(p):
    """One-time repack of PyTorch-layout params into the kernel layout.

    MXU operands are stored bf16 (halves weight DMA, native MXU datapath);
    biases stay f32 since all elementwise math is f32.
    """
    return dict(
        emb=p["embedding"].astype(jnp.bfloat16),                   # (V, H)
        w_ih_t=jnp.transpose(p["w_ih"]).astype(jnp.bfloat16),      # (H, 3H)
        w_hh_t=jnp.transpose(p["w_hh"]).astype(jnp.bfloat16),      # (H, 3H)
        b_ih=p["b_ih"].reshape(1, -1).astype(jnp.float32),         # (1, 3H)
        b_hh=p["b_hh"].reshape(1, -1).astype(jnp.float32),         # (1, 3H)
        w_fc_t=jnp.transpose(p["w_fc"]).astype(jnp.bfloat16),      # (H, V)
        b_fc=p["b_fc"].reshape(1, -1).astype(jnp.float32),         # (1, V)
    )


def decoder_rnn_forward(packed, input_step, last_hidden, encoder_outputs=None):
    # encoder_outputs is accepted to match DecoderRNN.forward but unused
    # (this decoder has no attention).
    del encoder_outputs
    B = input_step.shape[1]
    H = last_hidden.shape[-1]
    V = packed["b_fc"].shape[-1]

    ids2d = input_step[0].reshape(B, 1).astype(jnp.int32)          # (B, 1)
    h0 = last_hidden[0].astype(jnp.float32)                        # (B, H)

    vmem = pl.BlockSpec(memory_space=pltpu.MemorySpace.VMEM)
    output, h_new = pl.pallas_call(
        _decoder_step_kernel,
        out_shape=(jax.ShapeDtypeStruct((B, V), jnp.float32),
                   jax.ShapeDtypeStruct((B, H), jnp.float32)),
        in_specs=[vmem] * 9,
        out_specs=(vmem, vmem),
    )(ids2d, packed["emb"], h0,
      packed["w_ih_t"], packed["w_hh_t"], packed["b_ih"], packed["b_hh"],
      packed["w_fc_t"], packed["b_fc"])

    return output, h_new[None]          # hidden shaped (1, B, H) like nn.GRU


def init_params(key, hidden, output):
    """PyTorch-layout parameters (for packing and for the pure-JAX reference)."""
    ks = jax.random.split(key, 7)
    s = 1.0 / np.sqrt(hidden)
    emb = jax.random.normal(ks[0], (output, hidden), jnp.float32) * 0.1
    w_ih = jax.random.uniform(ks[1], (3 * hidden, hidden), jnp.float32, -s, s)
    w_hh = jax.random.uniform(ks[2], (3 * hidden, hidden), jnp.float32, -s, s)
    b_ih = jax.random.uniform(ks[3], (3 * hidden,), jnp.float32, -s, s)
    b_hh = jax.random.uniform(ks[4], (3 * hidden,), jnp.float32, -s, s)
    w_fc = jax.random.uniform(ks[5], (output, hidden), jnp.float32, -s, s)
    b_fc = jax.random.uniform(ks[6], (output,), jnp.float32, -s, s)
    return dict(embedding=emb, w_ih=w_ih, w_hh=w_hh, b_ih=b_ih, b_hh=b_hh,
                w_fc=w_fc, b_fc=b_fc)


def ref_forward(params, input_step, last_hidden, encoder_outputs=None):
    """Pure-JAX f32 reference with PyTorch GRU/Linear/log_softmax math."""
    del encoder_outputs
    H = last_hidden.shape[-1]
    x = params["embedding"][input_step[0]].astype(jnp.float32)     # (B, H)
    h = last_hidden[0].astype(jnp.float32)
    gi = x @ params["w_ih"].T + params["b_ih"]
    gh = h @ params["w_hh"].T + params["b_hh"]
    r = jax.nn.sigmoid(gi[:, :H] + gh[:, :H])
    z = jax.nn.sigmoid(gi[:, H:2 * H] + gh[:, H:2 * H])
    n = jnp.tanh(gi[:, 2 * H:] + r * gh[:, 2 * H:])
    h_new = (1.0 - z) * n + z * h
    logits = h_new @ params["w_fc"].T + params["b_fc"]
    output = jax.nn.log_softmax(logits, axis=1)
    return output, h_new[None]


if __name__ == "__main__":
    H, V, B, S_ENC = 128, 256, 8, 10          # hidden, output vocab, batch, enc len
    key = jax.random.PRNGKey(0)
    k_par, k_tok, k_hid, k_enc = jax.random.split(key, 4)

    params = init_params(k_par, H, V)
    packed = pack_params(params)

    input_step = jax.random.randint(k_tok, (1, B), 0, V, dtype=jnp.int32)
    last_hidden = jax.random.normal(k_hid, (1, B, H), jnp.float32)
    encoder_outputs = jax.random.normal(k_enc, (S_ENC, B, H), jnp.float32)  # unused (no attention)

    output, hidden = decoder_rnn_forward(packed, input_step, last_hidden,
                                         encoder_outputs)
    jax.block_until_ready((output, hidden))

    ref_out, ref_hid = ref_forward(params, input_step, last_hidden, encoder_outputs)
    # bf16 weight storage (per perf review) => relaxed parity tolerance vs the
    # pure-f32 PyTorch-math reference; carry/gate/log-softmax math stays f32.
    np.testing.assert_allclose(np.asarray(output), np.asarray(ref_out),
                               rtol=2e-2, atol=2e-2)
    np.testing.assert_allclose(np.asarray(hidden), np.asarray(ref_hid),
                               rtol=2e-2, atol=2e-2)

    assert output.shape == (B, V) and hidden.shape == (1, B, H)
    print("KERNEL_OK")
</pallas_src>

<mosaic_0001>
module attributes {stable_mosaic.version = 11 : i64} {
  func.func @_decoder_step_kernel(%arg0: memref<8x1xi32, #tpu.memory_space<vmem>>, %arg1: memref<256x128xbf16, #tpu.memory_space<vmem>>, %arg2: memref<8x128xf32, #tpu.memory_space<vmem>>, %arg3: memref<128x384xbf16, #tpu.memory_space<vmem>>, %arg4: memref<128x384xbf16, #tpu.memory_space<vmem>>, %arg5: memref<1x384xf32, #tpu.memory_space<vmem>>, %arg6: memref<1x384xf32, #tpu.memory_space<vmem>>, %arg7: memref<128x256xbf16, #tpu.memory_space<vmem>>, %arg8: memref<1x256xf32, #tpu.memory_space<vmem>>, %arg9: memref<8x256xf32, #tpu.memory_space<vmem>>, %arg10: memref<8x128xf32, #tpu.memory_space<vmem>>) attributes {dimension_semantics = [], scalar_prefetch = 0 : i64, scratch_operands = 0 : i64, tpu.core_type = #tpu.core_type<tc>} {
    %c0 = arith.constant 0 : index
    %c0_0 = arith.constant 0 : index
    %0 = vector.load %arg0[%c0, %c0_0] : memref<8x1xi32, #tpu.memory_space<vmem>>, vector<8x1xi32>
    %1 = tpu.iota {dimensions = array<i32: 1>} : vector<8x256xi32>
    %2 = vector.broadcast %0 : vector<8x1xi32> to vector<8x256xi32>
    %3 = arith.cmpi eq, %1, %2 : vector<8x256xi32>
    %4 = arith.extui %3 : vector<8x256xi1> to vector<8x256xi32>
    %5 = arith.sitofp %4 : vector<8x256xi32> to vector<8x256xf32>
    %6 = arith.truncf %5 : vector<8x256xf32> to vector<8x256xbf16>
    %c0_1 = arith.constant 0 : index
    %c0_2 = arith.constant 0 : index
    %7 = vector.load %arg1[%c0_1, %c0_2] : memref<256x128xbf16, #tpu.memory_space<vmem>>, vector<256x128xbf16>
    %cst = arith.constant dense<0.000000e+00> : vector<8x128xf32>
    %8 = tpu.matmul %6, %7, %cst {dimension_numbers = #tpu.dot_dimension_numbers<[1], [0], [0], [1], [0, 0, 1, 1], [], []>} : vector<8x256xbf16>, vector<256x128xbf16>, vector<8x128xf32> -> vector<8x128xf32>
    %c0_3 = arith.constant 0 : index
    %c0_4 = arith.constant 0 : index
    %9 = vector.load %arg2[%c0_3, %c0_4] : memref<8x128xf32, #tpu.memory_space<vmem>>, vector<8x128xf32>
    %10 = arith.truncf %8 : vector<8x128xf32> to vector<8x128xbf16>
    %c0_5 = arith.constant 0 : index
    %c0_6 = arith.constant 0 : index
    %11 = vector.load %arg3[%c0_5, %c0_6] : memref<128x384xbf16, #tpu.memory_space<vmem>>, vector<128x384xbf16>
    %cst_7 = arith.constant dense<0.000000e+00> : vector<8x384xf32>
    %12 = tpu.matmul %10, %11, %cst_7 {dimension_numbers = #tpu.dot_dimension_numbers<[1], [0], [0], [1], [0, 0, 1, 1], [], []>} : vector<8x128xbf16>, vector<128x384xbf16>, vector<8x384xf32> -> vector<8x384xf32>
    %c0_8 = arith.constant 0 : index
    %c0_9 = arith.constant 0 : index
    %13 = vector.load %arg5[%c0_8, %c0_9] : memref<1x384xf32, #tpu.memory_space<vmem>>, vector<1x384xf32>
    %14 = vector.broadcast %13 : vector<1x384xf32> to vector<8x384xf32>
    %15 = arith.addf %12, %14 : vector<8x384xf32>
    %16 = arith.truncf %9 : vector<8x128xf32> to vector<8x128xbf16>
    %c0_10 = arith.constant 0 : index
    %c0_11 = arith.constant 0 : index
    %17 = vector.load %arg4[%c0_10, %c0_11] : memref<128x384xbf16, #tpu.memory_space<vmem>>, vector<128x384xbf16>
    %cst_12 = arith.constant dense<0.000000e+00> : vector<8x384xf32>
    %18 = tpu.matmul %16, %17, %cst_12 {dimension_numbers = #tpu.dot_dimension_numbers<[1], [0], [0], [1], [0, 0, 1, 1], [], []>} : vector<8x128xbf16>, vector<128x384xbf16>, vector<8x384xf32> -> vector<8x384xf32>
    %c0_13 = arith.constant 0 : index
    %c0_14 = arith.constant 0 : index
    %19 = vector.load %arg6[%c0_13, %c0_14] : memref<1x384xf32, #tpu.memory_space<vmem>>, vector<1x384xf32>
    %20 = vector.broadcast %19 : vector<1x384xf32> to vector<8x384xf32>
    %21 = arith.addf %18, %20 : vector<8x384xf32>
    %22 = vector.extract_strided_slice %15 {offsets = [0, 0], sizes = [8, 128], strides = [1, 1]} : vector<8x384xf32> to vector<8x128xf32>
    %23 = vector.extract_strided_slice %21 {offsets = [0, 0], sizes = [8, 128], strides = [1, 1]} : vector<8x384xf32> to vector<8x128xf32>
    %24 = arith.addf %22, %23 : vector<8x128xf32>
    %25 = arith.negf %24 : vector<8x128xf32>
    %26 = math.exp %25 : vector<8x128xf32>
    %cst_15 = arith.constant 1.000000e+00 : f32
    %27 = vector.broadcast %cst_15 : f32 to vector<8x128xf32>
    %28 = arith.addf %27, %26 : vector<8x128xf32>
    %29 = arith.divf %27, %28 : vector<8x128xf32>
    %30 = vector.extract_strided_slice %15 {offsets = [0, 128], sizes = [8, 128], strides = [1, 1]} : vector<8x384xf32> to vector<8x128xf32>
    %31 = vector.extract_strided_slice %21 {offsets = [0, 128], sizes = [8, 128], strides = [1, 1]} : vector<8x384xf32> to vector<8x128xf32>
    %32 = arith.addf %30, %31 : vector<8x128xf32>
    %33 = arith.negf %32 : vector<8x128xf32>
    %34 = math.exp %33 : vector<8x128xf32>
    %cst_16 = arith.constant 1.000000e+00 : f32
    %35 = vector.broadcast %cst_16 : f32 to vector<8x128xf32>
    %36 = arith.addf %35, %34 : vector<8x128xf32>
    %37 = arith.divf %35, %36 : vector<8x128xf32>
    %38 = vector.extract_strided_slice %15 {offsets = [0, 256], sizes = [8, 128], strides = [1, 1]} : vector<8x384xf32> to vector<8x128xf32>
    %39 = vector.extract_strided_slice %21 {offsets = [0, 256], sizes = [8, 128], strides = [1, 1]} : vector<8x384xf32> to vector<8x128xf32>
    %40 = arith.mulf %29, %39 : vector<8x128xf32>
    %41 = arith.addf %38, %40 : vector<8x128xf32>
    %42 = math.tanh %41 : vector<8x128xf32>
    %cst_17 = arith.constant 1.000000e+00 : f32
    %43 = vector.broadcast %cst_17 : f32 to vector<8x128xf32>
    %44 = arith.subf %43, %37 : vector<8x128xf32>
    %45 = arith.mulf %44, %42 : vector<8x128xf32>
    %46 = arith.mulf %37, %9 : vector<8x128xf32>
    %47 = arith.addf %45, %46 : vector<8x128xf32>
    %c0_18 = arith.constant 0 : index
    %c0_19 = arith.constant 0 : index
    %48 = vector.load %arg10[%c0_18, %c0_19] : memref<8x128xf32, #tpu.memory_space<vmem>>, vector<8x128xf32>
    tpu.vector_store %arg10[%c0_18, %c0_19], %47 {strides = array<i32>} : memref<8x128xf32, #tpu.memory_space<vmem>>, vector<8x128xf32>,
    %49 = arith.truncf %47 : vector<8x128xf32> to vector<8x128xbf16>
    %c0_20 = arith.constant 0 : index
    %c0_21 = arith.constant 0 : index
    %50 = vector.load %arg7[%c0_20, %c0_21] : memref<128x256xbf16, #tpu.memory_space<vmem>>, vector<128x256xbf16>
    %cst_22 = arith.constant dense<0.000000e+00> : vector<8x256xf32>
    %51 = tpu.matmul %49, %50, %cst_22 {dimension_numbers = #tpu.dot_dimension_numbers<[1], [0], [0], [1], [0, 0, 1, 1], [], []>} : vector<8x128xbf16>, vector<128x256xbf16>, vector<8x256xf32> -> vector<8x256xf32>
    %c0_23 = arith.constant 0 : index
    %c0_24 = arith.constant 0 : index
    %52 = vector.load %arg8[%c0_23, %c0_24] : memref<1x256xf32, #tpu.memory_space<vmem>>, vector<1x256xf32>
    %53 = vector.broadcast %52 : vector<1x256xf32> to vector<8x256xf32>
    %54 = arith.addf %51, %53 : vector<8x256xf32>
    %cst_25 = arith.constant dense<0xFF800000> : vector<8xf32>
    %55 = vector.multi_reduction <maximumf>, %54, %cst_25 [1] : vector<8x256xf32> to vector<8xf32>
    %56 = vector.shape_cast %55 : vector<8xf32> to vector<8x1xf32>
    %57 = vector.broadcast %56 : vector<8x1xf32> to vector<8x256xf32>
    %58 = arith.subf %54, %57 : vector<8x256xf32>
    %59 = math.exp %58 : vector<8x256xf32>
    %cst_26 = arith.constant dense<0.000000e+00> : vector<8xf32>
    %60 = vector.multi_reduction <add>, %59, %cst_26 [1] : vector<8x256xf32> to vector<8xf32>
    %61 = vector.shape_cast %60 : vector<8xf32> to vector<8x1xf32>
    %62 = math.log %61 : vector<8x1xf32>
    %63 = vector.broadcast %62 : vector<8x1xf32> to vector<8x256xf32>
    %64 = arith.subf %58, %63 : vector<8x256xf32>
    %c0_27 = arith.constant 0 : index
    %c0_28 = arith.constant 0 : index
    %65 = vector.load %arg9[%c0_27, %c0_28] : memref<8x256xf32, #tpu.memory_space<vmem>>, vector<8x256xf32>
    tpu.vector_store %arg9[%c0_27, %c0_28], %64 {strides = array<i32>} : memref<8x256xf32, #tpu.memory_space<vmem>>, vector<8x256xf32>,
    return
  }
}

</mosaic_0001>

<llo_original>
// kernel: tpu_custom_call.1
$region0: #{tpu_custom_call.1}
  #allocation0 [shape = 'u32[]', space=smem, size = 0x4, offset = 0x4, fixed_abs, tag = 'smem constant byte address 0x4 - core index']
  #allocation1 [shape = 'u32[144,128]{1,0:T(1,128)}', space=vmem, size = 0x12000, scoped, tag = 'internal scratch']
  %s0 = inlined_call_operand.vmem [shape: s32[8,1], index: 0, kind: input, shape index: {}]
  %s1 = inlined_call_operand.hbm [shape: bf16[256,128], index: 1, kind: input, shape index: {}]
  %s2 = inlined_call_operand.vmem [shape: f32[8,128], index: 2, kind: input, shape index: {}]
  %s3 = inlined_call_operand.hbm [shape: bf16[128,384], index: 3, kind: input, shape index: {}]
  %s4 = inlined_call_operand.hbm [shape: bf16[128,384], index: 4, kind: input, shape index: {}]
  %s5 = inlined_call_operand.vmem [shape: f32[1,384], index: 5, kind: input, shape index: {}]
  %s6 = inlined_call_operand.vmem [shape: f32[1,384], index: 6, kind: input, shape index: {}]
  %s7 = inlined_call_operand.hbm [shape: bf16[128,256], index: 7, kind: input, shape index: {}]
  %s8 = inlined_call_operand.vmem [shape: f32[1,256], index: 8, kind: input, shape index: {}]
  %s9 = inlined_call_operand.hbm [shape: f32[8,256], index: 9, kind: output, shape index: {0}]
  %s10 = inlined_call_operand.hbm [shape: f32[8,128], index: 10, kind: output, shape index: {1}]
  %11 = xla_tuple %s9, %s10
  %s12 = sld [smem:[#allocation0]]
  $region70: #{tpu_custom_call.1} parent=0
    _
  %s14 = ssub.s32 1, %s12
  %s15 = scalar_select 0, %s14, %s12
  $region1: #{tpu_custom_call.1} parent=0
    #allocation2 [shape = 'u8[65536]{0}', space=vmem, size = 0x10000, scoped, tag = 'input window, operand 1, single buffered']
    #allocation3 [shape = 's32[1]{0}', space=sflag, size = 0x4, scoped, tag = 'scoped memory for tpu_custom_call.1']
    #allocation4 [shape = 's32[1]{0}', space=sflag, size = 0x4, scoped, tag = 'scoped memory for tpu_custom_call.1']
    #allocation5 [shape = 'u8[98304]{0}', space=vmem, size = 0x18000, scoped, tag = 'input window, operand 3, single buffered']
    #allocation6 [shape = 's32[1]{0}', space=sflag, size = 0x4, scoped, tag = 'scoped memory for tpu_custom_call.1']
    #allocation7 [shape = 'u8[98304]{0}', space=vmem, size = 0x18000, scoped, tag = 'input window, operand 4, single buffered']
    #allocation8 [shape = 'u8[65536]{0}', space=vmem, size = 0x10000, scoped, tag = 'input window, operand 7, single buffered']
    #allocation9 [shape = 's32[1]{0}', space=sflag, size = 0x4, scoped, tag = 'scoped memory for tpu_custom_call.1']
    #allocation10 [shape = 'u8[8192]{0}', space=vmem, size = 0x2000, scoped, tag = 'output window, operand 0, single buffered']
    #allocation11 [shape = 'u8[4096]{0}', space=vmem, size = 0x1000, scoped, tag = 'output window, operand 1, single buffered']
    #allocation12 [shape = 's32[1]{0}', space=sflag, size = 0x4, scoped, tag = 'scoped memory for tpu_custom_call.1']
    %16 = vsyncpa [#allocation3], 0
    %17 = vsyncpa [#allocation6], 0
    %18 = vsyncpa [#allocation9], 0
    %19 = vsyncpa [#allocation4], 0
    %20 = vsyncpa [#allocation12], 0
    // Predicated region
    $region2: #{tpu_custom_call.1} parent=1 // pred_check
      _
    $region3: #{tpu_custom_call.1} parent=1 // pred_check_branch
      %22 = sbr.rel (0) target = $region5
    $region4: #{tpu_custom_call.1} parent=1 // pred_region
      _
    $region5: #{tpu_custom_call.1} parent=1 // pred_fallthru
      _
    // Predicated region
    $region6: #{tpu_custom_call.1} parent=1 // pred_check
      _
    $region7: #{tpu_custom_call.1} parent=1 // pred_check_branch
      %24 = sbr.rel (0) target = $region9
    $region8: #{tpu_custom_call.1} parent=1 // pred_region
      %s26 = ssub.s32 2048, 2048
      %27 = vsyncadd [#allocation3], %s26
      %s28 = sshll.u32 [#allocation2], 4
      %s29 = int_to_ptr.vmem [resolvable:$true] %s28
      %34 = dma.hbm_to_vmem [thread:$0]  %s1, 2048, %s29, [#allocation3], 64, 64, 4
    $region9: #{tpu_custom_call.1} parent=1 // pred_fallthru
      _
    // Predicated region
    $region10: #{tpu_custom_call.1} parent=1 // pred_check
      _
    $region11: #{tpu_custom_call.1} parent=1 // pred_check_branch
      %36 = sbr.rel (0) target = $region13
    $region12: #{tpu_custom_call.1} parent=1 // pred_region
      _
    $region13: #{tpu_custom_call.1} parent=1 // pred_fallthru
      _
    // Predicated region
    $region14: #{tpu_custom_call.1} parent=1 // pred_check
      _
    $region15: #{tpu_custom_call.1} parent=1 // pred_check_branch
      %38 = sbr.rel (0) target = $region17
    $region16: #{tpu_custom_call.1} parent=1 // pred_region
      %s40 = ssub.s32 3072, 3072
      %41 = vsyncadd [#allocation6], %s40
      %s42 = sshll.u32 [#allocation5], 4
      %s43 = int_to_ptr.vmem [resolvable:$true] %s42
      %48 = dma.hbm_to_vmem [thread:$0]  %s3, 3072, %s43, [#allocation6], 192, 192, 12
    $region17: #{tpu_custom_call.1} parent=1 // pred_fallthru
      _
    // Predicated region
    $region18: #{tpu_custom_call.1} parent=1 // pred_check
      _
    $region19: #{tpu_custom_call.1} parent=1 // pred_check_branch
      %50 = sbr.rel (0) target = $region21
    $region20: #{tpu_custom_call.1} parent=1 // pred_region
      %s52 = ssub.s32 3072, 3072
      %53 = vsyncadd [#allocation6], %s52
      %s54 = sshll.u32 [#allocation7], 4
      %s55 = int_to_ptr.vmem [resolvable:$true] %s54
      %60 = dma.hbm_to_vmem [thread:$0]  %s4, 3072, %s55, [#allocation6], 192, 192, 12
    $region21: #{tpu_custom_call.1} parent=1 // pred_fallthru
      _
    // Predicated region
    $region22: #{tpu_custom_call.1} parent=1 // pred_check
      _
    $region23: #{tpu_custom_call.1} parent=1 // pred_check_branch
      %62 = sbr.rel (0) target = $region25
    $region24: #{tpu_custom_call.1} parent=1 // pred_region
      _
    $region25: #{tpu_custom_call.1} parent=1 // pred_fallthru
      _
    // Predicated region
    $region26: #{tpu_custom_call.1} parent=1 // pred_check
      _
    $region27: #{tpu_custom_call.1} parent=1 // pred_check_branch
      %64 = sbr.rel (0) target = $region29
    $region28: #{tpu_custom_call.1} parent=1 // pred_region
      _
    $region29: #{tpu_custom_call.1} parent=1 // pred_fallthru
      _
    // Predicated region
    $region30: #{tpu_custom_call.1} parent=1 // pred_check
      _
    $region31: #{tpu_custom_call.1} parent=1 // pred_check_branch
      %66 = sbr.rel (0) target = $region33
    $region32: #{tpu_custom_call.1} parent=1 // pred_region
      %s68 = ssub.s32 2048, 2048
      %69 = vsyncadd [#allocation9], %s68
      %s70 = sshll.u32 [#allocation8], 4
      %s71 = int_to_ptr.vmem [resolvable:$true] %s70
      %76 = dma.hbm_to_vmem [thread:$0]  %s7, 2048, %s71, [#allocation9], 128, 128, 8
    $region33: #{tpu_custom_call.1} parent=1 // pred_fallthru
      _
    // Predicated region
    $region34: #{tpu_custom_call.1} parent=1 // pred_check
      _
    $region35: #{tpu_custom_call.1} parent=1 // pred_check_branch
      %78 = sbr.rel (0) target = $region37
    $region36: #{tpu_custom_call.1} parent=1 // pred_region
      _
    $region37: #{tpu_custom_call.1} parent=1 // pred_fallthru
      _
    // Predicated region
    $region38: #{tpu_custom_call.1} parent=1 // pred_check
      _
    $region39: #{tpu_custom_call.1} parent=1 // pred_check_branch
      %80 = sbr.rel (0) target = $region41
    $region40: #{tpu_custom_call.1} parent=1 // pred_region
      %81 = dma.done [#allocation3], 2048
    $region41: #{tpu_custom_call.1} parent=1 // pred_fallthru
      _
    // Predicated region
    $region42: #{tpu_custom_call.1} parent=1 // pred_check
      _
    $region43: #{tpu_custom_call.1} parent=1 // pred_check_branch
      %83 = sbr.rel (0) target = $region45
    $region44: #{tpu_custom_call.1} parent=1 // pred_region
      %84 = dma.done [#allocation6], 3072
    $region45: #{tpu_custom_call.1} parent=1 // pred_fallthru
      _
    // Predicated region
    $region46: #{tpu_custom_call.1} parent=1 // pred_check
      _
    $region47: #{tpu_custom_call.1} parent=1 // pred_check_branch
      %86 = sbr.rel (0) target = $region49
    $region48: #{tpu_custom_call.1} parent=1 // pred_region
      %87 = dma.done [#allocation6], 3072
    $region49: #{tpu_custom_call.1} parent=1 // pred_fallthru
      _
    // Predicated region
    $region50: #{tpu_custom_call.1} parent=1 // pred_check
      _
    $region51: #{tpu_custom_call.1} parent=1 // pred_check_branch
      %89 = sbr.rel (0) target = $region53
    $region52: #{tpu_custom_call.1} parent=1 // pred_region
      %90 = dma.done [#allocation9], 2048
    $region53: #{tpu_custom_call.1} parent=1 // pred_fallthru
      _
    %v92 = vld [vmem:[%s0] sm:$0xff]
    %v93 = vlaneseq
    %v94 = vand.u32 %v93, 127
    %v95 = vadd.s32 %v94, 128
    %96 = vset.pattern.permute.xlu0 0
    %97 = vperm.xlu0 %96, %v92
    %v98 = vpop.permute.xlu0 %97
    %vm99 = vcmp.eq.s32.totalorder %v94, %v98
    %vm100 = vcmp.eq.s32.totalorder %v95, %v98
    %v101 = vsel %vm99, 1, 0
    %v102 = vsel %vm100, 1, 0
    %v103 = vcvt.s32.f32 %v101
    %v104 = vcvt.s32.f32 %v102
    %v105 = vpack.c.bf16 %v103, %v103
    %v106 = vpack.c.bf16 %v104, %v104
    %v107 = vld [vmem:[#allocation2] sm:$0xf]
    %v108 = vld [vmem:[#allocation2 + $0x4] sm:$0xf]
    %v109 = vld [vmem:[#allocation2 + $0x8] sm:$0xf]
    %v110 = vld [vmem:[#allocation2 + $0xc] sm:$0xf]
    %v111 = vld [vmem:[#allocation2 + $0x10] sm:$0xf]
    %v112 = vld [vmem:[#allocation2 + $0x14] sm:$0xf]
    %v113 = vld [vmem:[#allocation2 + $0x18] sm:$0xf]
    %v114 = vld [vmem:[#allocation2 + $0x1c] sm:$0xf]
    %v115 = vld [vmem:[#allocation2 + $0x20] sm:$0xf]
    %v116 = vld [vmem:[#allocation2 + $0x24] sm:$0xf]
    %v117 = vld [vmem:[#allocation2 + $0x28] sm:$0xf]
    %v118 = vld [vmem:[#allocation2 + $0x2c] sm:$0xf]
    %v119 = vld [vmem:[#allocation2 + $0x30] sm:$0xf]
    %v120 = vld [vmem:[#allocation2 + $0x34] sm:$0xf]
    %v121 = vld [vmem:[#allocation2 + $0x38] sm:$0xf]
    %v122 = vld [vmem:[#allocation2 + $0x3c] sm:$0xf]
    %v123 = vld [vmem:[#allocation2 + $0x40] sm:$0xf]
    %v124 = vld [vmem:[#allocation2 + $0x44] sm:$0xf]
    %v125 = vld [vmem:[#allocation2 + $0x48] sm:$0xf]
    %v126 = vld [vmem:[#allocation2 + $0x4c] sm:$0xf]
    %v127 = vld [vmem:[#allocation2 + $0x50] sm:$0xf]
    %v128 = vld [vmem:[#allocation2 + $0x54] sm:$0xf]
    %v129 = vld [vmem:[#allocation2 + $0x58] sm:$0xf]
    %v130 = vld [vmem:[#allocation2 + $0x5c] sm:$0xf]
    %v131 = vld [vmem:[#allocation2 + $0x60] sm:$0xf]
    %v132 = vld [vmem:[#allocation2 + $0x64] sm:$0xf]
    %v133 = vld [vmem:[#allocation2 + $0x68] sm:$0xf]
    %v134 = vld [vmem:[#allocation2 + $0x6c] sm:$0xf]
    %v135 = vld [vmem:[#allocation2 + $0x70] sm:$0xf]
    %v136 = vld [vmem:[#allocation2 + $0x74] sm:$0xf]
    %v137 = vld [vmem:[#allocation2 + $0x78] sm:$0xf]
    %v138 = vld [vmem:[#allocation2 + $0x7c] sm:$0xf]
    %v171 = vunpack.c.l.b16 %v107
    %v172 = vunpack.c.l.b16 %v108
    %v173 = vunpack.c.l.b16 %v109
    %v174 = vunpack.c.l.b16 %v110
    %v175 = vunpack.c.l.b16 %v111
    %v176 = vunpack.c.l.b16 %v112
    %v177 = vunpack.c.l.b16 %v113
    %v178 = vunpack.c.l.b16 %v114
    %v179 = vunpack.c.l.b16 %v115
    %v180 = vunpack.c.l.b16 %v116
    %v181 = vunpack.c.l.b16 %v117
    %v182 = vunpack.c.l.b16 %v118
    %v183 = vunpack.c.l.b16 %v119
    %v184 = vunpack.c.l.b16 %v120
    %v185 = vunpack.c.l.b16 %v121
    %v186 = vunpack.c.l.b16 %v122
    %v187 = vunpack.c.l.b16 %v123
    %v188 = vunpack.c.l.b16 %v124
    %v189 = vunpack.c.l.b16 %v125
    %v190 = vunpack.c.l.b16 %v126
    %v191 = vunpack.c.l.b16 %v127
    %v192 = vunpack.c.l.b16 %v128
    %v193 = vunpack.c.l.b16 %v129
    %v194 = vunpack.c.l.b16 %v130
    %v195 = vunpack.c.l.b16 %v131
    %v196 = vunpack.c.l.b16 %v132
    %v197 = vunpack.c.l.b16 %v133
    %v198 = vunpack.c.l.b16 %v134
    %v199 = vunpack.c.l.b16 %v135
    %v200 = vunpack.c.l.b16 %v136
    %v201 = vunpack.c.l.b16 %v137
    %v202 = vunpack.c.l.b16 %v138
    %v203 = vpack.c.b16 %v172, %v171
    %v204 = vpack.c.b16 %v174, %v173
    %v205 = vpack.c.b16 %v176, %v175
    %v206 = vpack.c.b16 %v178, %v177
    %v207 = vpack.c.b16 %v180, %v179
    %v208 = vpack.c.b16 %v182, %v181
    %v209 = vpack.c.b16 %v184, %v183
    %v210 = vpack.c.b16 %v186, %v185
    %v211 = vpack.c.b16 %v188, %v187
    %v212 = vpack.c.b16 %v190, %v189
    %v213 = vpack.c.b16 %v192, %v191
    %v214 = vpack.c.b16 %v194, %v193
    %v215 = vpack.c.b16 %v196, %v195
    %v216 = vpack.c.b16 %v198, %v197
    %v217 = vpack.c.b16 %v200, %v199
    %v218 = vpack.c.b16 %v202, %v201
    %235 = vmatprep.subr.bf16.mxu0 0
    %236 = vmatpush1.bf16.msra.mxu0 %v210
    %237 = vmatprep.subr.bf16.mxu0 0
    %238 = vmatpush1.bf16.msra.mxu0 %v209
    %239 = vmatprep.subr.bf16.mxu0 0
    %240 = vmatpush1.bf16.msra.mxu0 %v208
    %241 = vmatprep.subr.bf16.mxu0 0
    %242 = vmatpush1.bf16.msra.mxu0 %v207
    %243 = vmatprep.subr.bf16.mxu0 0
    %244 = vmatpush1.bf16.msra.mxu0 %v206
    %245 = vmatprep.subr.bf16.mxu0 0
    %246 = vmatpush1.bf16.msra.mxu0 %v205
    %247 = vmatprep.subr.bf16.mxu0 0
    %248 = vmatpush1.bf16.msra.mxu0 %v204
    %249 = vmatprep.subr.bf16.mxu0 0
    %250 = vmatpush1.bf16.msra.mxu0 %v203
    %251 = vmatprep.subr.bf16.mxu0 0
    %252 = vmatpush2.bf16.msra.mxu0 %v218
    %253 = vmatprep.subr.bf16.mxu0 0
    %254 = vmatpush2.bf16.msra.mxu0 %v217
    %255 = vmatprep.subr.bf16.mxu0 0
    %256 = vmatpush2.bf16.msra.mxu0 %v216
    %257 = vmatprep.subr.bf16.mxu0 0
    %258 = vmatpush2.bf16.msra.mxu0 %v215
    %259 = vmatprep.subr.bf16.mxu0 0
    %260 = vmatpush2.bf16.msra.mxu0 %v214
    %261 = vmatprep.subr.bf16.mxu0 0
    %262 = vmatpush2.bf16.msra.mxu0 %v213
    %263 = vmatprep.subr.bf16.mxu0 0
    %264 = vmatpush2.bf16.msra.mxu0 %v212
    %265 = vmatprep.subr.bf16.mxu0 0
    %266 = vmatpush2.bf16.msra.mxu0 %v211
    %267 = vmatprep.mubr.bf16.mxu0 %v106
    %268 = vmatmul.mubr.bf16.gmra.mxu0 %v105
    %v269 = vpop.f32.mrf.mxu0
    %v270 = vadd.f32 0.0, %v269
    %v271 = vpop.f32.mrf.mxu0
    %v272 = vpop.f32.mrf.mxu0
    %v273 = vpop.f32.mrf.mxu0
    %274 = vdwg.mxu0
    %v275 = vld [vmem:[%s2] sm:$0xff]
    %v276 = vpack.c.bf16 %v270, %v270
    %v277 = vld [vmem:[#allocation5] sm:$0xff]
    %v278 = vld [vmem:[#allocation5 + $0x8] sm:$0xf]
    %v279 = vld [vmem:[#allocation5 + $0xc] sm:$0xff]
    %v280 = vld [vmem:[#allocation5 + $0x14] sm:$0xf]
    %v281 = vld [vmem:[#allocation5 + $0x18] sm:$0xff]
    %v282 = vld [vmem:[#allocation5 + $0x20] sm:$0xf]
    %v283 = vld [vmem:[#allocation5 + $0x24] sm:$0xff]
    %v284 = vld [vmem:[#allocation5 + $0x2c] sm:$0xf]
    %v285 = vld [vmem:[#allocation5 + $0x30] sm:$0xff]
    %v286 = vld [vmem:[#allocation5 + $0x38] sm:$0xf]
    %v287 = vld [vmem:[#allocation5 + $0x3c] sm:$0xff]
    %v288 = vld [vmem:[#allocation5 + $0x44] sm:$0xf]
    %v289 = vld [vmem:[#allocation5 + $0x48] sm:$0xff]
    %v290 = vld [vmem:[#allocation5 + $0x50] sm:$0xf]
    %v291 = vld [vmem:[#allocation5 + $0x54] sm:$0xff]
    %v292 = vld [vmem:[#allocation5 + $0x5c] sm:$0xf]
    %v293 = vld [vmem:[#allocation5 + $0x60] sm:$0xff]
    %v294 = vld [vmem:[#allocation5 + $0x68] sm:$0xf]
    %v295 = vld [vmem:[#allocation5 + $0x6c] sm:$0xff]
    %v296 = vld [vmem:[#allocation5 + $0x74] sm:$0xf]
    %v297 = vld [vmem:[#allocation5 + $0x78] sm:$0xff]
    %v298 = vld [vmem:[#allocation5 + $0x80] sm:$0xf]
    %v299 = vld [vmem:[#allocation5 + $0x84] sm:$0xff]
    %v300 = vld [vmem:[#allocation5 + $0x8c] sm:$0xf]
    %v301 = vld [vmem:[#allocation5 + $0x90] sm:$0xff]
    %v302 = vld [vmem:[#allocation5 + $0x98] sm:$0xf]
    %v303 = vld [vmem:[#allocation5 + $0x9c] sm:$0xff]
    %v304 = vld [vmem:[#allocation5 + $0xa4] sm:$0xf]
    %v305 = vld [vmem:[#allocation5 + $0xa8] sm:$0xff]
    %v306 = vld [vmem:[#allocation5 + $0xb0] sm:$0xf]
    %v307 = vld [vmem:[#allocation5 + $0xb4] sm:$0xff]
    %v308 = vld [vmem:[#allocation5 + $0xbc] sm:$0xf]
    %v309 = vld [vmem:[%s5] sm:$0x7]
    %v311 = vlaneseq
    %v312 = vshrl.u32 %v311, 7
    %v313 = vsub.s32 0, %v312
    %v314 = vrot.slane %v309, %v313
    %v315 = vlaneseq
    %v316 = vshrl.u32 %v315, 7
    %v317 = vsub.s32 1, %v316
    %v318 = vrot.slane %v309, %v317
    %v319 = vlaneseq
    %v320 = vshrl.u32 %v319, 7
    %v321 = vsub.s32 2, %v320
    %v322 = vrot.slane %v309, %v321
    %v358 = vunpack.c.l.b16 %v277
    %v359 = vunpack.c.h.b16 %v277
    %v360 = vunpack.c.l.b16 %v278
    %v361 = vunpack.c.l.b16 %v279
    %v362 = vunpack.c.h.b16 %v279
    %v363 = vunpack.c.l.b16 %v280
    %v364 = vunpack.c.l.b16 %v281
    %v365 = vunpack.c.h.b16 %v281
    %v366 = vunpack.c.l.b16 %v282
    %v367 = vunpack.c.l.b16 %v283
    %v368 = vunpack.c.h.b16 %v283
    %v369 = vunpack.c.l.b16 %v284
    %v370 = vunpack.c.l.b16 %v285
    %v371 = vunpack.c.h.b16 %v285
    %v372 = vunpack.c.l.b16 %v286
    %v373 = vunpack.c.l.b16 %v287
    %v374 = vunpack.c.h.b16 %v287
    %v375 = vunpack.c.l.b16 %v288
    %v376 = vunpack.c.l.b16 %v289
    %v377 = vunpack.c.h.b16 %v289
    %v378 = vunpack.c.l.b16 %v290
    %v379 = vunpack.c.l.b16 %v291
    %v380 = vunpack.c.h.b16 %v291
    %v381 = vunpack.c.l.b16 %v292
    %v382 = vunpack.c.l.b16 %v293
    %v383 = vunpack.c.h.b16 %v293
    %v384 = vunpack.c.l.b16 %v294
    %v385 = vunpack.c.l.b16 %v295
    %v386 = vunpack.c.h.b16 %v295
    %v387 = vunpack.c.l.b16 %v296
    %v388 = vunpack.c.l.b16 %v297
    %v389 = vunpack.c.h.b16 %v297
    %v390 = vunpack.c.l.b16 %v298
    %v391 = vunpack.c.l.b16 %v299
    %v392 = vunpack.c.h.b16 %v299
    %v393 = vunpack.c.l.b16 %v300
    %v394 = vunpack.c.l.b16 %v301
    %v395 = vunpack.c.h.b16 %v301
    %v396 = vunpack.c.l.b16 %v302
    %v397 = vunpack.c.l.b16 %v303
    %v398 = vunpack.c.h.b16 %v303
    %v399 = vunpack.c.l.b16 %v304
    %v400 = vunpack.c.l.b16 %v305
    %v401 = vunpack.c.h.b16 %v305
    %v402 = vunpack.c.l.b16 %v306
    %v403 = vunpack.c.l.b16 %v307
    %v404 = vunpack.c.h.b16 %v307
    %v405 = vunpack.c.l.b16 %v308
    %v406 = vpack.c.b16 %v361, %v358
    %v407 = vpack.c.b16 %v362, %v359
    %v408 = vpack.c.b16 %v363, %v360
    %v409 = vpack.c.b16 %v367, %v364
    %v410 = vpack.c.b16 %v368, %v365
    %v411 = vpack.c.b16 %v369, %v366
    %v412 = vpack.c.b16 %v373, %v370
    %v413 = vpack.c.b16 %v374, %v371
    %v414 = vpack.c.b16 %v375, %v372
    %v415 = vpack.c.b16 %v379, %v376
    %v416 = vpack.c.b16 %v380, %v377
    %v417 = vpack.c.b16 %v381, %v378
    %v418 = vpack.c.b16 %v385, %v382
    %v419 = vpack.c.b16 %v386, %v383
    %v420 = vpack.c.b16 %v387, %v384
    %v421 = vpack.c.b16 %v391, %v388
    %v422 = vpack.c.b16 %v392, %v389
    %v423 = vpack.c.b16 %v393, %v390
    %v424 = vpack.c.b16 %v397, %v394
    %v425 = vpack.c.b16 %v398, %v395
    %v426 = vpack.c.b16 %v399, %v396
    %v427 = vpack.c.b16 %v403, %v400
    %v428 = vpack.c.b16 %v404, %v401
    %v429 = vpack.c.b16 %v405, %v402
    %454 = vmatprep.subr.bf16.mxu0 %v428
    %455 = vmatpush1.bf16.msra.mxu0 %v427
    %456 = vmatprep.subr.bf16.mxu0 %v425
    %457 = vmatpush1.bf16.msra.mxu0 %v424
    %458 = vmatprep.subr.bf16.mxu0 %v422
    %459 = vmatpush1.bf16.msra.mxu0 %v421
    %460 = vmatprep.subr.bf16.mxu0 %v419
    %461 = vmatpush1.bf16.msra.mxu0 %v418
    %462 = vmatprep.subr.bf16.mxu0 %v416
    %463 = vmatpush1.bf16.msra.mxu0 %v415
    %464 = vmatprep.subr.bf16.mxu0 %v413
    %465 = vmatpush1.bf16.msra.mxu0 %v412
    %466 = vmatprep.subr.bf16.mxu0 %v410
    %467 = vmatpush1.bf16.msra.mxu0 %v409
    %468 = vmatprep.subr.bf16.mxu0 %v407
    %469 = vmatpush1.bf16.msra.mxu0 %v406
    %470 = vmatprep.subr.bf16.mxu0 0
    %471 = vmatpush2.bf16.msra.mxu0 0
    %472 = vmatprep.subr.bf16.mxu0 0
    %473 = vmatpush2.bf16.msra.mxu0 0
    %474 = vmatprep.subr.bf16.mxu0 0
    %475 = vmatpush2.bf16.msra.mxu0 0
    %476 = vmatprep.subr.bf16.mxu0 0
    %477 = vmatpush2.bf16.msra.mxu0 0
    %478 = vmatprep.subr.bf16.mxu0 0
    %479 = vmatpush2.bf16.msra.mxu0 0
    %480 = vmatprep.subr.bf16.mxu0 0
    %481 = vmatpush2.bf16.msra.mxu0 0
    %482 = vmatprep.subr.bf16.mxu0 0
    %483 = vmatpush2.bf16.msra.mxu0 0
    %484 = vmatprep.subr.bf16.mxu0 0
    %485 = vmatpush2.bf16.msra.mxu0 0
    %486 = vmatprep.mubr.bf16.mxu0 0
    %487 = vmatmul.mubr.bf16.gmra.mxu0 %v276
    %v488 = vpop.f32.mrf.mxu0
    %v489 = vadd.f32 %v314, %v488
    %v490 = vpop.f32.mrf.mxu0
    %v491 = vadd.f32 %v318, %v490
    %v492 = vpop.f32.mrf.mxu0
    %v493 = vpop.f32.mrf.mxu0
    %494 = vdwg.mxu0
    %495 = vmatprep.subr.bf16.mxu0 0
    %496 = vmatpush1.bf16.msra.mxu0 %v429
    %497 = vmatprep.subr.bf16.mxu0 0
    %498 = vmatpush1.bf16.msra.mxu0 %v426
    %499 = vmatprep.subr.bf16.mxu0 0
    %500 = vmatpush1.bf16.msra.mxu0 %v423
    %501 = vmatprep.subr.bf16.mxu0 0
    %502 = vmatpush1.bf16.msra.mxu0 %v420
    %503 = vmatprep.subr.bf16.mxu0 0
    %504 = vmatpush1.bf16.msra.mxu0 %v417
    %505 = vmatprep.subr.bf16.mxu0 0
    %506 = vmatpush1.bf16.msra.mxu0 %v414
    %507 = vmatprep.subr.bf16.mxu0 0
    %508 = vmatpush1.bf16.msra.mxu0 %v411
    %509 = vmatprep.subr.bf16.mxu0 0
    %510 = vmatpush1.bf16.msra.mxu0 %v408
    %511 = vmatprep.subr.bf16.mxu0 0
    %512 = vmatpush2.bf16.msra.mxu0 0
    %513 = vmatprep.subr.bf16.mxu0 0
    %514 = vmatpush2.bf16.msra.mxu0 0
    %515 = vmatprep.subr.bf16.mxu0 0
    %516 = vmatpush2.bf16.msra.mxu0 0
    %517 = vmatprep.subr.bf16.mxu0 0
    %518 = vmatpush2.bf16.msra.mxu0 0
    %519 = vmatprep.subr.bf16.mxu0 0
    %520 = vmatpush2.bf16.msra.mxu0 0
    %521 = vmatprep.subr.bf16.mxu0 0
    %522 = vmatpush2.bf16.msra.mxu0 0
    %523 = vmatprep.subr.bf16.mxu0 0
    %524 = vmatpush2.bf16.msra.mxu0 0
    %525 = vmatprep.subr.bf16.mxu0 0
    %526 = vmatpush2.bf16.msra.mxu0 0
    %527 = vmatprep.mubr.bf16.mxu0 0
    %528 = vmatmul.mubr.bf16.gmra.mxu0 %v276
    %v529 = vpop.f32.mrf.mxu0
    %v530 = vadd.f32 %v322, %v529
    %v531 = vpop.f32.mrf.mxu0
    %v532 = vpop.f32.mrf.mxu0
    %v533 = vpop.f32.mrf.mxu0
    %534 = vdwg.mxu0
    %v535 = vpack.c.bf16 %v275, %v275
    %v536 = vld [vmem:[#allocation7] sm:$0xff]
    %v537 = vld [vmem:[#allocation7 + $0x8] sm:$0xf]
    %v538 = vld [vmem:[#allocation7 + $0xc] sm:$0xff]
    %v539 = vld [vmem:[#allocation7 + $0x14] sm:$0xf]
    %v540 = vld [vmem:[#allocation7 + $0x18] sm:$0xff]
    %v541 = vld [vmem:[#allocation7 + $0x20] sm:$0xf]
    %v542 = vld [vmem:[#allocation7 + $0x24] sm:$0xff]
    %v543 = vld [vmem:[#allocation7 + $0x2c] sm:$0xf]
    %v544 = vld [vmem:[#allocation7 + $0x30] sm:$0xff]
    %v545 = vld [vmem:[#allocation7 + $0x38] sm:$0xf]
    %v546 = vld [vmem:[#allocation7 + $0x3c] sm:$0xff]
    %v547 = vld [vmem:[#allocation7 + $0x44] sm:$0xf]
    %v548 = vld [vmem:[#allocation7 + $0x48] sm:$0xff]
    %v549 = vld [vmem:[#allocation7 + $0x50] sm:$0xf]
    %v550 = vld [vmem:[#allocation7 + $0x54] sm:$0xff]
    %v551 = vld [vmem:[#allocation7 + $0x5c] sm:$0xf]
    %v552 = vld [vmem:[#allocation7 + $0x60] sm:$0xff]
    %v553 = vld [vmem:[#allocation7 + $0x68] sm:$0xf]
    %v554 = vld [vmem:[#allocation7 + $0x6c] sm:$0xff]
    %v555 = vld [vmem:[#allocation7 + $0x74] sm:$0xf]
    %v556 = vld [vmem:[#allocation7 + $0x78] sm:$0xff]
    %v557 = vld [vmem:[#allocation7 + $0x80] sm:$0xf]
    %v558 = vld [vmem:[#allocation7 + $0x84] sm:$0xff]
    %v559 = vld [vmem:[#allocation7 + $0x8c] sm:$0xf]
    %v560 = vld [vmem:[#allocation7 + $0x90] sm:$0xff]
    %v561 = vld [vmem:[#allocation7 + $0x98] sm:$0xf]
    %v562 = vld [vmem:[#allocation7 + $0x9c] sm:$0xff]
    %v563 = vld [vmem:[#allocation7 + $0xa4] sm:$0xf]
    %v564 = vld [vmem:[#allocation7 + $0xa8] sm:$0xff]
    %v565 = vld [vmem:[#allocation7 + $0xb0] sm:$0xf]
    %v566 = vld [vmem:[#allocation7 + $0xb4] sm:$0xff]
    %v567 = vld [vmem:[#allocation7 + $0xbc] sm:$0xf]
    %v568 = vld [vmem:[%s6] sm:$0x7]
    %v570 = vlaneseq
    %v571 = vshrl.u32 %v570, 7
    %v572 = vsub.s32 0, %v571
    %v573 = vrot.slane %v568, %v572
    %v574 = vlaneseq
    %v575 = vshrl.u32 %v574, 7
    %v576 = vsub.s32 1, %v575
    %v577 = vrot.slane %v568, %v576
    %v578 = vlaneseq
    %v579 = vshrl.u32 %v578, 7
    %v580 = vsub.s32 2, %v579
    %v581 = vrot.slane %v568, %v580
    %v617 = vunpack.c.l.b16 %v536
    %v618 = vunpack.c.h.b16 %v536
    %v619 = vunpack.c.l.b16 %v537
    %v620 = vunpack.c.l.b16 %v538
    %v621 = vunpack.c.h.b16 %v538
    %v622 = vunpack.c.l.b16 %v539
    %v623 = vunpack.c.l.b16 %v540
    %v624 = vunpack.c.h.b16 %v540
    %v625 = vunpack.c.l.b16 %v541
    %v626 = vunpack.c.l.b16 %v542
    %v627 = vunpack.c.h.b16 %v542
    %v628 = vunpack.c.l.b16 %v543
    %v629 = vunpack.c.l.b16 %v544
    %v630 = vunpack.c.h.b16 %v544
    %v631 = vunpack.c.l.b16 %v545
    %v632 = vunpack.c.l.b16 %v546
    %v633 = vunpack.c.h.b16 %v546
    %v634 = vunpack.c.l.b16 %v547
    %v635 = vunpack.c.l.b16 %v548
    %v636 = vunpack.c.h.b16 %v548
    %v637 = vunpack.c.l.b16 %v549
    %v638 = vunpack.c.l.b16 %v550
    %v639 = vunpack.c.h.b16 %v550
    %v640 = vunpack.c.l.b16 %v551
    %v641 = vunpack.c.l.b16 %v552
    %v642 = vunpack.c.h.b16 %v552
    %v643 = vunpack.c.l.b16 %v553
    %v644 = vunpack.c.l.b16 %v554
    %v645 = vunpack.c.h.b16 %v554
    %v646 = vunpack.c.l.b16 %v555
    %v647 = vunpack.c.l.b16 %v556
    %v648 = vunpack.c.h.b16 %v556
    %v649 = vunpack.c.l.b16 %v557
    %v650 = vunpack.c.l.b16 %v558
    %v651 = vunpack.c.h.b16 %v558
    %v652 = vunpack.c.l.b16 %v559
    %v653 = vunpack.c.l.b16 %v560
    %v654 = vunpack.c.h.b16 %v560
    %v655 = vunpack.c.l.b16 %v561
    %v656 = vunpack.c.l.b16 %v562
    %v657 = vunpack.c.h.b16 %v562
    %v658 = vunpack.c.l.b16 %v563
    %v659 = vunpack.c.l.b16 %v564
    %v660 = vunpack.c.h.b16 %v564
    %v661 = vunpack.c.l.b16 %v565
    %v662 = vunpack.c.l.b16 %v566
    %v663 = vunpack.c.h.b16 %v566
    %v664 = vunpack.c.l.b16 %v567
    %v665 = vpack.c.b16 %v620, %v617
    %v666 = vpack.c.b16 %v621, %v618
    %v667 = vpack.c.b16 %v622, %v619
    %v668 = vpack.c.b16 %v626, %v623
    %v669 = vpack.c.b16 %v627, %v624
    %v670 = vpack.c.b16 %v628, %v625
    %v671 = vpack.c.b16 %v632, %v629
    %v672 = vpack.c.b16 %v633, %v630
    %v673 = vpack.c.b16 %v634, %v631
    %v674 = vpack.c.b16 %v638, %v635
    %v675 = vpack.c.b16 %v639, %v636
    %v676 = vpack.c.b16 %v640, %v637
    %v677 = vpack.c.b16 %v644, %v641
    %v678 = vpack.c.b16 %v645, %v642
    %v679 = vpack.c.b16 %v646, %v643
    %v680 = vpack.c.b16 %v650, %v647
    %v681 = vpack.c.b16 %v651, %v648
    %v682 = vpack.c.b16 %v652, %v649
    %v683 = vpack.c.b16 %v656, %v653
    %v684 = vpack.c.b16 %v657, %v654
    %v685 = vpack.c.b16 %v658, %v655
    %v686 = vpack.c.b16 %v662, %v659
    %v687 = vpack.c.b16 %v663, %v660
    %v688 = vpack.c.b16 %v664, %v661
    %713 = vmatprep.subr.bf16.mxu0 %v687
    %714 = vmatpush1.bf16.msra.mxu0 %v686
    %715 = vmatprep.subr.bf16.mxu0 %v684
    %716 = vmatpush1.bf16.msra.mxu0 %v683
    %717 = vmatprep.subr.bf16.mxu0 %v681
    %718 = vmatpush1.bf16.msra.mxu0 %v680
    %719 = vmatprep.subr.bf16.mxu0 %v678
    %720 = vmatpush1.bf16.msra.mxu0 %v677
    %721 = vmatprep.subr.bf16.mxu0 %v675
    %722 = vmatpush1.bf16.msra.mxu0 %v674
    %723 = vmatprep.subr.bf16.mxu0 %v672
    %724 = vmatpush1.bf16.msra.mxu0 %v671
    %725 = vmatprep.subr.bf16.mxu0 %v669
    %726 = vmatpush1.bf16.msra.mxu0 %v668
    %727 = vmatprep.subr.bf16.mxu0 %v666
    %728 = vmatpush1.bf16.msra.mxu0 %v665
    %729 = vmatprep.subr.bf16.mxu0 0
    %730 = vmatpush2.bf16.msra.mxu0 0
    %731 = vmatprep.subr.bf16.mxu0 0
    %732 = vmatpush2.bf16.msra.mxu0 0
    %733 = vmatprep.subr.bf16.mxu0 0
    %734 = vmatpush2.bf16.msra.mxu0 0
    %735 = vmatprep.subr.bf16.mxu0 0
    %736 = vmatpush2.bf16.msra.mxu0 0
    %737 = vmatprep.subr.bf16.mxu0 0
    %738 = vmatpush2.bf16.msra.mxu0 0
    %739 = vmatprep.subr.bf16.mxu0 0
    %740 = vmatpush2.bf16.msra.mxu0 0
    %741 = vmatprep.subr.bf16.mxu0 0
    %742 = vmatpush2.bf16.msra.mxu0 0
    %743 = vmatprep.subr.bf16.mxu0 0
    %744 = vmatpush2.bf16.msra.mxu0 0
    %745 = vmatprep.mubr.bf16.mxu0 0
    %746 = vmatmul.mubr.bf16.gmra.mxu0 %v535
    %v747 = vpop.f32.mrf.mxu0
    %v748 = vadd.f32 %v573, %v747
    %v749 = vpop.f32.mrf.mxu0
    %v750 = vadd.f32 %v577, %v749
    %v751 = vpop.f32.mrf.mxu0
    %v752 = vpop.f32.mrf.mxu0
    %753 = vdwg.mxu0
    %754 = vmatprep.subr.bf16.mxu0 0
    %755 = vmatpush1.bf16.msra.mxu0 %v688
    %756 = vmatprep.subr.bf16.mxu0 0
    %757 = vmatpush1.bf16.msra.mxu0 %v685
    %758 = vmatprep.subr.bf16.mxu0 0
    %759 = vmatpush1.bf16.msra.mxu0 %v682
    %760 = vmatprep.subr.bf16.mxu0 0
    %761 = vmatpush1.bf16.msra.mxu0 %v679
    %762 = vmatprep.subr.bf16.mxu0 0
    %763 = vmatpush1.bf16.msra.mxu0 %v676
    %764 = vmatprep.subr.bf16.mxu0 0
    %765 = vmatpush1.bf16.msra.mxu0 %v673
    %766 = vmatprep.subr.bf16.mxu0 0
    %767 = vmatpush1.bf16.msra.mxu0 %v670
    %768 = vmatprep.subr.bf16.mxu0 0
    %769 = vmatpush1.bf16.msra.mxu0 %v667
    %770 = vmatprep.subr.bf16.mxu0 0
    %771 = vmatpush2.bf16.msra.mxu0 0
    %772 = vmatprep.subr.bf16.mxu0 0
    %773 = vmatpush2.bf16.msra.mxu0 0
    %774 = vmatprep.subr.bf16.mxu0 0
    %775 = vmatpush2.bf16.msra.mxu0 0
    %776 = vmatprep.subr.bf16.mxu0 0
    %777 = vmatpush2.bf16.msra.mxu0 0
    %778 = vmatprep.subr.bf16.mxu0 0
    %779 = vmatpush2.bf16.msra.mxu0 0
    %780 = vmatprep.subr.bf16.mxu0 0
    %781 = vmatpush2.bf16.msra.mxu0 0
    %782 = vmatprep.subr.bf16.mxu0 0
    %783 = vmatpush2.bf16.msra.mxu0 0
    %784 = vmatprep.subr.bf16.mxu0 0
    %785 = vmatpush2.bf16.msra.mxu0 0
    %786 = vmatprep.mubr.bf16.mxu0 0
    %787 = vmatmul.mubr.bf16.gmra.mxu0 %v535
    %v788 = vpop.f32.mrf.mxu0
    %v789 = vadd.f32 %v581, %v788
    %v790 = vpop.f32.mrf.mxu0
    %v791 = vpop.f32.mrf.mxu0
    %v792 = vpop.f32.mrf.mxu0
    %793 = vdwg.mxu0
    %v794 = vadd.f32 %v489, %v748
    %v795 = vxor.u32 %v794, 2147483648
    %v796 = vmul.f32 %v795, 1.442695
    %v797 = vpow.pop %v796
    %v798 = vadd.f32 %v797, 1.0
    %v799 = vrcp.pop %v798
    %v800 = vmul.f32 1.0, %v799
    %v801 = vadd.f32 %v491, %v750
    %v802 = vxor.u32 %v801, 2147483648
    %v803 = vmul.f32 %v802, 1.442695
    %v804 = vpow.pop %v803
    %v805 = vadd.f32 %v804, 1.0
    %v806 = vrcp.pop %v805
    %v807 = vmul.f32 1.0, %v806
    %v808 = vmul.f32 %v800, %v789
    %v809 = vadd.f32 %v530, %v808
    %v810 = vtanh.pop %v809
    %v811 = vsub.f32 1.0, %v807
    %v812 = vmul.f32 %v811, %v810
    %v813 = vmul.f32 %v807, %v275
    %v814 = vadd.f32 %v812, %v813
    %815 = vst [vmem:[#allocation11] sm:$0xff] %v814
    %v816 = vpack.c.bf16 %v814, %v814
    %v817 = vld [vmem:[#allocation8] sm:$0xff]
    %v818 = vld [vmem:[#allocation8 + $0x8] sm:$0xff]
    %v819 = vld [vmem:[#allocation8 + $0x10] sm:$0xff]
    %v820 = vld [vmem:[#allocation8 + $0x18] sm:$0xff]
    %v821 = vld [vmem:[#allocation8 + $0x20] sm:$0xff]
    %v822 = vld [vmem:[#allocation8 + $0x28] sm:$0xff]
    %v823 = vld [vmem:[#allocation8 + $0x30] sm:$0xff]
    %v824 = vld [vmem:[#allocation8 + $0x38] sm:$0xff]
    %v825 = vld [vmem:[#allocation8 + $0x40] sm:$0xff]
    %v826 = vld [vmem:[#allocation8 + $0x48] sm:$0xff]
    %v827 = vld [vmem:[#allocation8 + $0x50] sm:$0xff]
    %v828 = vld [vmem:[#allocation8 + $0x58] sm:$0xff]
    %v829 = vld [vmem:[#allocation8 + $0x60] sm:$0xff]
    %v830 = vld [vmem:[#allocation8 + $0x68] sm:$0xff]
    %v831 = vld [vmem:[#allocation8 + $0x70] sm:$0xff]
    %v832 = vld [vmem:[#allocation8 + $0x78] sm:$0xff]
    %v833 = vld [vmem:[%s8] sm:$0x3]
    %v835 = vlaneseq
    %v836 = vshrl.u32 %v835, 7
    %v837 = vsub.s32 0, %v836
    %v838 = vrot.slane %v833, %v837
    %v839 = vlaneseq
    %v840 = vshrl.u32 %v839, 7
    %v841 = vsub.s32 1, %v840
    %v842 = vrot.slane %v833, %v841
    %v861 = vunpack.c.l.b16 %v817
    %v862 = vunpack.c.h.b16 %v817
    %v863 = vunpack.c.l.b16 %v818
    %v864 = vunpack.c.h.b16 %v818
    %v865 = vunpack.c.l.b16 %v819
    %v866 = vunpack.c.h.b16 %v819
    %v867 = vunpack.c.l.b16 %v820
    %v868 = vunpack.c.h.b16 %v820
    %v869 = vunpack.c.l.b16 %v821
    %v870 = vunpack.c.h.b16 %v821
    %v871 = vunpack.c.l.b16 %v822
    %v872 = vunpack.c.h.b16 %v822
    %v873 = vunpack.c.l.b16 %v823
    %v874 = vunpack.c.h.b16 %v823
    %v875 = vunpack.c.l.b16 %v824
    %v876 = vunpack.c.h.b16 %v824
    %v877 = vunpack.c.l.b16 %v825
    %v878 = vunpack.c.h.b16 %v825
    %v879 = vunpack.c.l.b16 %v826
    %v880 = vunpack.c.h.b16 %v826
    %v881 = vunpack.c.l.b16 %v827
    %v882 = vunpack.c.h.b16 %v827
    %v883 = vunpack.c.l.b16 %v828
    %v884 = vunpack.c.h.b16 %v828
    %v885 = vunpack.c.l.b16 %v829
    %v886 = vunpack.c.h.b16 %v829
    %v887 = vunpack.c.l.b16 %v830
    %v888 = vunpack.c.h.b16 %v830
    %v889 = vunpack.c.l.b16 %v831
    %v890 = vunpack.c.h.b16 %v831
    %v891 = vunpack.c.l.b16 %v832
    %v892 = vunpack.c.h.b16 %v832
    %v893 = vpack.c.b16 %v863, %v861
    %v894 = vpack.c.b16 %v864, %v862
    %v895 = vpack.c.b16 %v867, %v865
    %v896 = vpack.c.b16 %v868, %v866
    %v897 = vpack.c.b16 %v871, %v869
    %v898 = vpack.c.b16 %v872, %v870
    %v899 = vpack.c.b16 %v875, %v873
    %v900 = vpack.c.b16 %v876, %v874
    %v901 = vpack.c.b16 %v879, %v877
    %v902 = vpack.c.b16 %v880, %v878
    %v903 = vpack.c.b16 %v883, %v881
    %v904 = vpack.c.b16 %v884, %v882
    %v905 = vpack.c.b16 %v887, %v885
    %v906 = vpack.c.b16 %v888, %v886
    %v907 = vpack.c.b16 %v891, %v889
    %v908 = vpack.c.b16 %v892, %v890
    %925 = vmatprep.subr.bf16.mxu0 %v908
    %926 = vmatpush1.bf16.msra.mxu0 %v907
    %927 = vmatprep.subr.bf16.mxu0 %v906
    %928 = vmatpush1.bf16.msra.mxu0 %v905
    %929 = vmatprep.subr.bf16.mxu0 %v904
    %930 = vmatpush1.bf16.msra.mxu0 %v903
    %931 = vmatprep.subr.bf16.mxu0 %v902
    %932 = vmatpush1.bf16.msra.mxu0 %v901
    %933 = vmatprep.subr.bf16.mxu0 %v900
    %934 = vmatpush1.bf16.msra.mxu0 %v899
    %935 = vmatprep.subr.bf16.mxu0 %v898
    %936 = vmatpush1.bf16.msra.mxu0 %v897
    %937 = vmatprep.subr.bf16.mxu0 %v896
    %938 = vmatpush1.bf16.msra.mxu0 %v895
    %939 = vmatprep.subr.bf16.mxu0 %v894
    %940 = vmatpush1.bf16.msra.mxu0 %v893
    %941 = vmatprep.subr.bf16.mxu0 0
    %942 = vmatpush2.bf16.msra.mxu0 0
    %943 = vmatprep.subr.bf16.mxu0 0
    %944 = vmatpush2.bf16.msra.mxu0 0
    %945 = vmatprep.subr.bf16.mxu0 0
    %946 = vmatpush2.bf16.msra.mxu0 0
    %947 = vmatprep.subr.bf16.mxu0 0
    %948 = vmatpush2.bf16.msra.mxu0 0
    %949 = vmatprep.subr.bf16.mxu0 0
    %950 = vmatpush2.bf16.msra.mxu0 0
    %951 = vmatprep.subr.bf16.mxu0 0
    %952 = vmatpush2.bf16.msra.mxu0 0
    %953 = vmatprep.subr.bf16.mxu0 0
    %954 = vmatpush2.bf16.msra.mxu0 0
    %955 = vmatprep.subr.bf16.mxu0 0
    %956 = vmatpush2.bf16.msra.mxu0 0
    %957 = vmatprep.mubr.bf16.mxu0 0
    %958 = vmatmul.mubr.bf16.gmra.mxu0 %v816
    %v959 = vpop.f32.mrf.mxu0
    %v960 = vadd.f32 %v838, %v959
    %v961 = vpop.f32.mrf.mxu0
    %v962 = vadd.f32 %v842, %v961
    %v963 = vpop.f32.mrf.mxu0
    %v964 = vpop.f32.mrf.mxu0
    %965 = vdwg.mxu0
    %v966 = vmax.f32 %v960, %v962
    %967 = vmax.xlane.f32.xlu0 %v966
    %v968 = vpop.xlane.xlu0 %967
    %v969 = vsub.f32 %v960, %v968
    %v970 = vsub.f32 %v962, %v968
    %v971 = vmul.f32 %v969, 1.442695
    %v972 = vpow.pop %v971
    %v973 = vmul.f32 %v970, 1.442695
    %v974 = vpow.pop %v973
    %v975 = vadd.f32 %v972, %v974
    %976 = vadd.xlane.f32.xlu0 %v975
    %v977 = vpop.xlane.xlu0 %976
    %v978 = vlog2.pop %v977
    %v979 = vmul.f32 %v978, 0.6931472
    %v980 = vsub.f32 %v969, %v979
    %v981 = vsub.f32 %v970, %v979
    %982 = vst [vmem:[#allocation10] sm:$0xff] %v980
    %983 = vst [vmem:[#allocation10 + $0x8] sm:$0xff] %v981
    // Predicated region
    $region54: #{tpu_custom_call.1} parent=1 // pred_check
      _
    $region55: #{tpu_custom_call.1} parent=1 // pred_check_branch
      %985 = sbr.rel (0) target = $region57
    $region56: #{tpu_custom_call.1} parent=1 // pred_region
      %s987 = ssub.s32 256, 256
      %988 = vsyncadd [#allocation4], %s987
      %s990 = sshll.u32 [#allocation10], 4
      %s991 = int_to_ptr.vmem [resolvable:$true] %s990
      %993 = dma.vmem_to_hbm [thread:$0]  %s991, 256, %s9, [#allocation4]
    $region57: #{tpu_custom_call.1} parent=1 // pred_fallthru
      _
    // Predicated region
    $region58: #{tpu_custom_call.1} parent=1 // pred_check
      _
    $region59: #{tpu_custom_call.1} parent=1 // pred_check_branch
      %995 = sbr.rel (0) target = $region61
    $region60: #{tpu_custom_call.1} parent=1 // pred_region
      %s997 = ssub.s32 128, 128
      %998 = vsyncadd [#allocation12], %s997
      %s1000 = sshll.u32 [#allocation11], 4
      %s1001 = int_to_ptr.vmem [resolvable:$true] %s1000
      %1003 = dma.vmem_to_hbm [thread:$0]  %s1001, 128, %s10, [#allocation12]
    $region61: #{tpu_custom_call.1} parent=1 // pred_fallthru
      _
    // Predicated region
    $region62: #{tpu_custom_call.1} parent=1 // pred_check
      _
    $region63: #{tpu_custom_call.1} parent=1 // pred_check_branch
      %1005 = sbr.rel (0) target = $region65
    $region64: #{tpu_custom_call.1} parent=1 // pred_region
      %1006 = dma.done [#allocation4], 256
    $region65: #{tpu_custom_call.1} parent=1 // pred_fallthru
      _
    // Predicated region
    $region66: #{tpu_custom_call.1} parent=1 // pred_check
      _
    $region67: #{tpu_custom_call.1} parent=1 // pred_check_branch
      %1008 = sbr.rel (0) target = $region69
    $region68: #{tpu_custom_call.1} parent=1 // pred_region
      %1009 = dma.done [#allocation12], 128
    $region69: #{tpu_custom_call.1} parent=1 // pred_fallthru
      _
    %1010 = vsyncpa [#allocation3], 1
    %1011 = vsyncpa [#allocation6], 1
    %1012 = vsyncpa [#allocation9], 1
    %1013 = vsyncpa [#allocation4], 1
    %1014 = vsyncpa [#allocation12], 1

</llo_original>
